<compile_context>
chip_gen: v6e
topology: v6e:2x2x1
jax: 0.10.0
libtpu: 0.0.40
codegen_flags: <defaults>
</compile_context>

<pallas_src>
import jax
import jax.numpy as jnp
from jax import lax
from jax.experimental import pallas as pl
from jax.experimental.pallas import tpu as pltpu


# ---------------------------------------------------------------------------
# Kernel
# ---------------------------------------------------------------------------
def ball_projection_kernel(x_ref, o_ref):
    # First read: f32 reduction (sum of squares per row).
    xf = x_ref[...].astype(jnp.float32)
    mean_sq = jnp.mean(xf * xf, axis=1, keepdims=True)            # (TN, 1)
    scale = lax.rsqrt(mean_sq + 1e-8)                             # EUP rsqrt (~free slot)
    # Second read for the scale-multiply: avoids keeping a full f32 upcast
    # tile live across the reduction (matters for bf16/int8 inputs).
    o_ref[...] = (x_ref[...].astype(jnp.float32) * scale).astype(o_ref.dtype)
    # NOTE: when the last grid block is partial, rows beyond N contain stale
    # VMEM data and may produce NaN/Inf here; those output rows are masked on
    # store and never reach HBM.


# ---------------------------------------------------------------------------
# Host-side sizing helpers (generation-aware, all wrapped defensively)
# ---------------------------------------------------------------------------
def _device_kind():
    try:
        return jax.devices()[0].device_kind.lower()
    except Exception:
        return ""


def _vmem_capacity_bytes():
    try:
        return int(pltpu.get_tpu_info().vmem_capacity_bytes)
    except Exception:
        return 64 << 20  # conservative (v7x-sized) fallback


def _target_block_bytes(kind):
    # Mem-bound kernel: amortize the ~0.35us per-grid-step cost against DMA time.
    if "v5 lite" in kind or "v5e" in kind or "v5lite" in kind:
        return 2 << 20   # ~0.82 TB/s HBM: 2 MiB already near roofline
    if "v6" in kind:
        return 6 << 20   # 128 MiB VMEM, ~1.4 TB/s: larger blocks amortize overhead
    if "7" in kind:
        return 4 << 20   # 64 MiB VMEM, 3.2 TB/s: bigger blocks but tighter VMEM
    return 4 << 20


def _cores_per_chip(kind):
    # Chips whose TensorCores share a grid via dimension_semantics "parallel".
    if "7" in kind or "v4" in kind or "v5p" in kind:
        return 2
    return 1


def _choose_tile_n(N, D, itemsize, target_block_bytes, n_cores):
    """Pick an N-tile: sublane-packed, ~target_block_bytes per input block."""
    pack = max(8, 32 // itemsize)               # 8 rows/vreg for f32, 16 for bf16, ...
    n_rounded = pl.cdiv(N, pack) * pack
    row_bytes = max(D * itemsize, 1)

    tile_n = max(pack, (target_block_bytes // row_bytes) // pack * pack)
    tile_n = min(tile_n, n_rounded)             # never bigger than the data

    # Multi-TC chips only: give each core >= 2 blocks so it can double-buffer.
    if n_cores > 1:
        min_steps = 2 * n_cores
        if pl.cdiv(N, tile_n) < min_steps and n_rounded >= min_steps * pack:
            tile_n = max(pack, pl.cdiv(pl.cdiv(n_rounded, min_steps), pack) * pack)
    return tile_n


# ---------------------------------------------------------------------------
# Wrapper
# ---------------------------------------------------------------------------
def ball_projection(x, *, tile_n=None, min_pallas_bytes=512 << 10):
    """x: (N, D) float array. Returns x / sqrt(mean(x**2, axis=1, keepdims=True) + 1e-8)."""
    N, D = x.shape
    itemsize = jnp.dtype(x.dtype).itemsize
    total_bytes = N * D * itemsize

    # Tiny problem: fixed pallas_call/DMA setup dominates; XLA fuses this fine.
    if total_bytes <= min_pallas_bytes:
        return ball_projection_ref(x)

    kind = _device_kind()
    n_cores = _cores_per_chip(kind)
    pack = max(8, 32 // itemsize)

    if tile_n is None:
        tile_n = _choose_tile_n(N, D, itemsize, _target_block_bytes(kind), n_cores)
    else:
        tile_n = max(pack, pl.cdiv(int(tile_n), pack) * pack)

    grid = (pl.cdiv(N, tile_n),)                 # partial last block masked by Pallas

    # VMEM budget: double-buffered in + out blocks, f32 working set, headroom;
    # capped below the physical capacity for this generation.
    block_bytes = tile_n * D * itemsize
    vmem_needed = 4 * block_bytes + 2 * tile_n * D * 4 + (8 << 20)
    vmem_cap = _vmem_capacity_bytes()
    vmem_limit = max(min(vmem_needed, vmem_cap - (12 << 20)), 16 << 20)

    out = pl.pallas_call(
        ball_projection_kernel,
        out_shape=jax.ShapeDtypeStruct((N, D), x.dtype),
        grid_spec=pltpu.PrefetchScalarGridSpec(
            num_scalar_prefetch=0,
            grid=grid,
            in_specs=[pl.BlockSpec((tile_n, D), lambda i: (i, 0))],
            out_specs=pl.BlockSpec((tile_n, D), lambda i: (i, 0)),
        ),
        compiler_params=pltpu.CompilerParams(
            dimension_semantics=("parallel",),
            vmem_limit_bytes=int(vmem_limit),
        ),
        cost_estimate=pl.CostEstimate(
            flops=3 * N * D,
            transcendentals=N,
            bytes_accessed=2 * N * D * itemsize,
        ),
    )(x)
    return out


def ball_projection_ref(x):
    # Pure-JAX reference mirroring the PyTorch forward.
    return x / jnp.sqrt(
        jnp.mean(x.astype(jnp.float32) ** 2, axis=1, keepdims=True) + 1e-8
    ).astype(x.dtype)


# ---------------------------------------------------------------------------
# Self-test
# ---------------------------------------------------------------------------
if __name__ == "__main__":
    key = jax.random.PRNGKey(0)

    # Small noise batch, latent_code_size = 128 (matches the PyTorch use case).
    N, D = 16, 128
    x = jax.random.normal(key, (N, D), dtype=jnp.float32)

    # Force the Pallas path even at this tiny size so the kernel itself runs.
    out = jax.block_until_ready(ball_projection(x, min_pallas_bytes=0))
    ref = ball_projection_ref(x)
    assert out.shape == x.shape and out.dtype == x.dtype
    assert jnp.allclose(out, ref, atol=1e-5, rtol=1e-5), "mismatch vs reference (small)"

    # Default (auto) path for the same tiny shape goes through the fused JAX expr.
    out_auto = jax.block_until_ready(ball_projection(x))
    assert jnp.allclose(out_auto, ref, atol=1e-6, rtol=1e-6), "mismatch (auto path)"

    # Larger, non-divisible batch exercises the masked partial last block.
    key2 = jax.random.PRNGKey(1)
    N2, D2 = 1000, 256
    x2 = jax.random.normal(key2, (N2, D2), dtype=jnp.float32)
    out2 = jax.block_until_ready(ball_projection(x2, tile_n=256, min_pallas_bytes=0))
    ref2 = ball_projection_ref(x2)
    assert out2.shape == x2.shape
    assert jnp.allclose(out2, ref2, atol=1e-5, rtol=1e-5), "mismatch vs reference (tiled)"

    print("KERNEL_OK")
</pallas_src>

<mosaic_0001>
module attributes {stable_mosaic.version = 11 : i64} {
  func.func @ball_projection_kernel(%arg0: i32, %arg1: memref<16x128xf32, #tpu.memory_space<vmem>>, %arg2: memref<16x128xf32, #tpu.memory_space<vmem>>) attributes {dimension_semantics = [#tpu.dimension_semantics<parallel>], iteration_bounds = array<i64: 1>, scalar_prefetch = 0 : i64, scratch_operands = 0 : i64, tpu.core_type = #tpu.core_type<tc>, window_params = [{transform_indices = @transform_0, window_bounds = array<i64: 16, 128>}, {transform_indices = @transform_1, window_bounds = array<i64: 16, 128>}]} {
    %c0 = arith.constant 0 : index
    %c0_0 = arith.constant 0 : index
    %0 = vector.load %arg1[%c0, %c0_0] : memref<16x128xf32, #tpu.memory_space<vmem>>, vector<16x128xf32>
    %1 = arith.mulf %0, %0 : vector<16x128xf32>
    %cst = arith.constant dense<0.000000e+00> : vector<16xf32>
    %2 = vector.multi_reduction <add>, %1, %cst [1] : vector<16x128xf32> to vector<16xf32>
    %3 = vector.shape_cast %2 : vector<16xf32> to vector<16x1xf32>
    %cst_1 = arith.constant 1.280000e+02 : f32
    %4 = vector.broadcast %cst_1 : f32 to vector<16x1xf32>
    %5 = arith.divf %3, %4 : vector<16x1xf32>
    %cst_2 = arith.constant 9.99999993E-9 : f32
    %6 = vector.broadcast %cst_2 : f32 to vector<16x1xf32>
    %7 = arith.addf %5, %6 : vector<16x1xf32>
    %8 = math.rsqrt %7 : vector<16x1xf32>
    %c0_3 = arith.constant 0 : index
    %c0_4 = arith.constant 0 : index
    %9 = vector.load %arg1[%c0_3, %c0_4] : memref<16x128xf32, #tpu.memory_space<vmem>>, vector<16x128xf32>
    %10 = vector.broadcast %8 : vector<16x1xf32> to vector<16x128xf32>
    %11 = arith.mulf %9, %10 : vector<16x128xf32>
    %c0_5 = arith.constant 0 : index
    %c0_6 = arith.constant 0 : index
    %12 = vector.load %arg2[%c0_5, %c0_6] : memref<16x128xf32, #tpu.memory_space<vmem>>, vector<16x128xf32>
    tpu.vector_store %arg2[%c0_5, %c0_6], %11 {strides = array<i32>} : memref<16x128xf32, #tpu.memory_space<vmem>>, vector<16x128xf32>,
    return
  }
  func.func @transform_0(%arg0: i32) -> (i32, i32) {
    %c0_i32 = arith.constant 0 : i32
    %c0_i32_0 = arith.constant 0 : i32
    return %arg0, %c0_i32 : i32, i32
  }
  func.func @transform_1(%arg0: i32) -> (i32, i32) {
    %c0_i32 = arith.constant 0 : i32
    %c0_i32_0 = arith.constant 0 : i32
    return %arg0, %c0_i32 : i32, i32
  }
}

</mosaic_0001>

<llo_original>
// kernel: tpu_custom_call.1
$region0: #{tpu_custom_call.1}
  #allocation0 [shape = 'u32[]', space=smem, size = 0x4, offset = 0x4, fixed_abs, tag = 'smem constant byte address 0x4 - core index']
  #allocation1 [shape = 'u32[144,128]{1,0:T(1,128)}', space=vmem, size = 0x12000, scoped, tag = 'internal scratch']
  %s0 = inlined_call_operand.hbm [shape: f32[16,128], index: 0, kind: input, shape index: {}]
  %s1 = inlined_call_operand.hbm [shape: f32[16,128], index: 1, kind: output, shape index: {}]
  %s2 = sld [smem:[#allocation0]]
  $region18: #{tpu_custom_call.1} parent=0
    _
  %s4 = ssub.s32 1, %s2
  %s5 = scalar_select 0, %s4, %s2
  $region1: #{tpu_custom_call.1} parent=0
    #allocation2 [shape = 'u8[8192]{0}', space=vmem, size = 0x2000, scoped, tag = 'input window, operand 0, single buffered']
    #allocation3 [shape = 's32[1]{0}', space=sflag, size = 0x4, scoped, tag = 'scoped memory for tpu_custom_call.1']
    #allocation4 [shape = 's32[1]{0}', space=sflag, size = 0x4, scoped, tag = 'scoped memory for tpu_custom_call.1']
    #allocation5 [shape = 'u8[8192]{0}', space=vmem, size = 0x2000, scoped, tag = 'output window, operand 0, single buffered']
    %6 = vsyncpa [#allocation3], 0
    %7 = vsyncpa [#allocation4], 0
    // Predicated region
    $region2: #{tpu_custom_call.1} parent=1 // pred_check
      _
    $region3: #{tpu_custom_call.1} parent=1 // pred_check_branch
      %9 = sbr.rel (0) target = $region5
    $region4: #{tpu_custom_call.1} parent=1 // pred_region
      %s11 = ssub.s32 256, 256
      %12 = vsyncadd [#allocation3], %s11
      %s13 = sshll.u32 [#allocation2], 4
      %s14 = int_to_ptr.vmem [resolvable:$true] %s13
      %19 = dma.hbm_to_vmem [thread:$0]  %s0, 256, %s14, [#allocation3], 128, 128, 8
    $region5: #{tpu_custom_call.1} parent=1 // pred_fallthru
      _
    // Predicated region
    $region6: #{tpu_custom_call.1} parent=1 // pred_check
      _
    $region7: #{tpu_custom_call.1} parent=1 // pred_check_branch
      %21 = sbr.rel (0) target = $region9
    $region8: #{tpu_custom_call.1} parent=1 // pred_region
      %22 = dma.done [#allocation3], 256
    $region9: #{tpu_custom_call.1} parent=1 // pred_fallthru
      _
    %v23 = vld [vmem:[#allocation2] sm:$0xff]
    %v24 = vld [vmem:[#allocation2 + $0x8] sm:$0xff]
    %v25 = vmul.f32 %v23, %v23
    %v26 = vmul.f32 %v24, %v24
    %27 = vadd.xlane.f32.xlu0 %v25
    %v28 = vpop.xlane.xlu0 %27
    %29 = vadd.xlane.f32.xlu0 %v26
    %v30 = vpop.xlane.xlu0 %29
    %v31 = vrcp.pop 128.0
    %v32 = vmul.f32 %v28, %v31
    %v33 = vmul.f32 %v30, %v31
    %v34 = vadd.f32 %v32, 1e-08
    %v35 = vadd.f32 %v33, 1e-08
    %v36 = vrsqrt.pop %v34
    %v37 = vrsqrt.pop %v35
    %v38 = vmul.f32 %v23, %v36
    %v39 = vmul.f32 %v24, %v37
    %40 = vst [vmem:[#allocation5] sm:$0xff] %v38
    %41 = vst [vmem:[#allocation5 + $0x8] sm:$0xff] %v39
    // Predicated region
    $region10: #{tpu_custom_call.1} parent=1 // pred_check
      _
    $region11: #{tpu_custom_call.1} parent=1 // pred_check_branch
      %43 = sbr.rel (0) target = $region13
    $region12: #{tpu_custom_call.1} parent=1 // pred_region
      %s45 = ssub.s32 256, 256
      %46 = vsyncadd [#allocation4], %s45
      %s47 = sshll.u32 [#allocation5], 4
      %s48 = int_to_ptr.vmem [resolvable:$true] %s47
      %53 = dma.vmem_to_hbm [thread:$0]  %s48, 256, %s1, [#allocation4], 128, 128, 8
    $region13: #{tpu_custom_call.1} parent=1 // pred_fallthru
      _
    // Predicated region
    $region14: #{tpu_custom_call.1} parent=1 // pred_check
      _
    $region15: #{tpu_custom_call.1} parent=1 // pred_check_branch
      %55 = sbr.rel (0) target = $region17
    $region16: #{tpu_custom_call.1} parent=1 // pred_region
      %56 = dma.done [#allocation4], 256
    $region17: #{tpu_custom_call.1} parent=1 // pred_fallthru
      _
    %57 = vsyncpa [#allocation3], 1
    %58 = vsyncpa [#allocation4], 1

</llo_original>
